<compile_context>
chip_gen: v6e
topology: v6e:2x2x1
jax: 0.10.0
libtpu: 0.0.40
codegen_flags: <defaults>
</compile_context>

<pallas_src>
import functools

import jax
import jax.numpy as jnp
from jax.experimental import pallas as pl
from jax.experimental.pallas import tpu as pltpu


def _round_up(v, m):
    return ((v + m - 1) // m) * m


def _vmem_limit_bytes():
    """Generation-aware scoped-VMEM limit (v5e/v6e: 128 MiB phys, v7x: 64 MiB)."""
    try:
        cap = int(pltpu.get_tpu_info().vmem_capacity_bytes)
    except Exception:
        cap = 64 * 1024 * 1024  # conservative fallback (v7x-sized)
    return max(32 * 1024 * 1024, min((cap * 3) // 4, 96 * 1024 * 1024))


def _pick_tm(N, C, pipeline_bytes_per_row, temp_bytes_per_row, block_itemsize,
             vmem_limit):
    # Fit double-buffered input pipeline + f32 tile temporaries in ~half the
    # scoped VMEM budget, and cap each operand block at ~2 MiB.
    per_row = max(pipeline_bytes_per_row + temp_bytes_per_row, 1)
    tm_budget = (vmem_limit // 2) // per_row
    tm_blockcap = (2 * 1024 * 1024) // max(C * block_itemsize, 1)
    tm = min(tm_budget, tm_blockcap)
    tm = max(8, (tm // 8) * 8)
    return min(tm, _round_up(N, 8))


# ----------------------------------------------------------------------------
# Kernels
# ----------------------------------------------------------------------------

def _dense_kernel(x_ref, t_ref, out_ref, *, confidence, smoothing, inv_c,
                  total_rows, tm):
    i = pl.program_id(0)

    x = x_ref[...].astype(jnp.float32)        # (tm, C)
    t = t_ref[...].astype(jnp.float32)        # (tm, C)

    # Numerically-stable logsumexp along the class (lane) axis.
    m = jnp.max(x, axis=-1, keepdims=True)                              # (tm, 1)
    shifted = x - m                                                     # (tm, C)
    lse = jnp.log(jnp.sum(jnp.exp(shifted), axis=-1, keepdims=True))    # (tm, 1)

    # Fused loss algebra (exact for arbitrary soft targets):
    #   loss = lse*(conf*sum(t) + sm) - sum_C(shifted * (conf*t + sm/C))
    s_t = jnp.sum(t, axis=-1, keepdims=True)                            # (tm, 1)
    w = confidence * t + (smoothing * inv_c)                            # (tm, C)
    s_w = jnp.sum(shifted * w, axis=-1, keepdims=True)                  # (tm, 1)
    loss = lse * (confidence * s_t + smoothing) - s_w                   # (tm, 1)

    # Mask ragged rows of the last block (no wrapper padding; garbage rows 0).
    row_ids = i * tm + jax.lax.broadcasted_iota(jnp.int32, (tm, 1), 0)
    loss = jnp.where(row_ids < total_rows, loss, 0.0)

    # Per-block partial sum -> this block's lane-dense output slab.
    out_ref[...] = jnp.broadcast_to(jnp.sum(loss), (1, 8, 128)).astype(jnp.float32)


def _onehot_kernel(x_ref, lbl_ref, out_ref, *, confidence, smoothing, inv_c,
                   total_rows, tm):
    i = pl.program_id(0)

    x = x_ref[...].astype(jnp.float32)        # (tm, C)
    lbl = lbl_ref[...]                        # (tm, 1) int32

    m = jnp.max(x, axis=-1, keepdims=True)
    shifted = x - m
    lse = jnp.log(jnp.sum(jnp.exp(shifted), axis=-1, keepdims=True))    # (tm, 1)

    # One-hot target: sum(t)=1 so loss = lse - sum(shifted * w) with
    # w = conf*onehot + sm/C built via a broadcasted-iota compare.
    class_ids = jax.lax.broadcasted_iota(jnp.int32, x.shape, 1)          # (tm, C)
    w = jnp.where(class_ids == lbl,
                  confidence + smoothing * inv_c,
                  smoothing * inv_c)
    s_w = jnp.sum(shifted * w, axis=-1, keepdims=True)                   # (tm, 1)
    loss = lse - s_w                                                     # (tm, 1)

    row_ids = i * tm + jax.lax.broadcasted_iota(jnp.int32, (tm, 1), 0)
    loss = jnp.where(row_ids < total_rows, loss, 0.0)

    out_ref[...] = jnp.broadcast_to(jnp.sum(loss), (1, 8, 128)).astype(jnp.float32)


# ----------------------------------------------------------------------------
# Wrappers
# ----------------------------------------------------------------------------

def label_smoothing_loss(x, target, smoothing=0.1, tm=None):
    """Training-mode LabelSmoothing forward. x, target: [N, C] (soft/one-hot)."""
    assert x.shape == target.shape
    N, C = x.shape
    confidence = 1.0 - smoothing

    x_item = jnp.dtype(x.dtype).itemsize
    t_item = jnp.dtype(target.dtype).itemsize
    vmem_limit = _vmem_limit_bytes()
    if tm is None:
        pipe = 2 * C * (x_item + t_item)   # double-buffered x + target blocks
        temps = 4 * C * 4                  # f32 x, w, shifted, exp temporaries
        tm = _pick_tm(N, C, pipe, temps, max(x_item, t_item), vmem_limit)
    tm = max(8, min((tm // 8) * 8, _round_up(N, 8)))
    num_blocks = (N + tm - 1) // tm        # ragged last block masked in-kernel

    kernel = functools.partial(
        _dense_kernel, confidence=confidence, smoothing=smoothing,
        inv_c=1.0 / C, total_rows=N, tm=tm)

    partials = pl.pallas_call(
        kernel,
        out_shape=jax.ShapeDtypeStruct((num_blocks, 8, 128), jnp.float32),
        grid_spec=pltpu.PrefetchScalarGridSpec(
            num_scalar_prefetch=0,
            grid=(num_blocks,),
            in_specs=[
                pl.BlockSpec((tm, C), lambda i: (i, 0)),
                pl.BlockSpec((tm, C), lambda i: (i, 0)),
            ],
            out_specs=pl.BlockSpec((1, 8, 128), lambda i: (i, 0, 0)),
        ),
        compiler_params=pltpu.CompilerParams(
            dimension_semantics=("parallel",),
            vmem_limit_bytes=vmem_limit,
        ),
    )(x, target)

    return jnp.sum(partials[:, 0, 0]) / jnp.float32(N)


def label_smoothing_loss_onehot(x, labels, smoothing=0.1, tm=None):
    """Fast path for one-hot targets: x [N, C], labels [N] int. Streams only x."""
    N, C = x.shape
    confidence = 1.0 - smoothing
    labels2d = labels.reshape(N, 1).astype(jnp.int32)

    x_item = jnp.dtype(x.dtype).itemsize
    vmem_limit = _vmem_limit_bytes()
    if tm is None:
        pipe = 2 * C * x_item + 2 * 1 * 4  # double-buffered x block + label column
        temps = 3 * C * 4                  # f32 x, shifted/exp, weighted product
        tm = _pick_tm(N, C, pipe, temps, x_item, vmem_limit)
    tm = max(8, min((tm // 8) * 8, _round_up(N, 8)))
    num_blocks = (N + tm - 1) // tm

    kernel = functools.partial(
        _onehot_kernel, confidence=confidence, smoothing=smoothing,
        inv_c=1.0 / C, total_rows=N, tm=tm)

    partials = pl.pallas_call(
        kernel,
        out_shape=jax.ShapeDtypeStruct((num_blocks, 8, 128), jnp.float32),
        grid_spec=pltpu.PrefetchScalarGridSpec(
            num_scalar_prefetch=0,
            grid=(num_blocks,),
            in_specs=[
                pl.BlockSpec((tm, C), lambda i: (i, 0)),
                pl.BlockSpec((tm, 1), lambda i: (i, 0)),
            ],
            out_specs=pl.BlockSpec((1, 8, 128), lambda i: (i, 0, 0)),
        ),
        compiler_params=pltpu.CompilerParams(
            dimension_semantics=("parallel",),
            vmem_limit_bytes=vmem_limit,
        ),
    )(x, labels2d)

    return jnp.sum(partials[:, 0, 0]) / jnp.float32(N)


def _reference(x, target, smoothing=0.1):
    confidence = 1.0 - smoothing
    x = x.astype(jnp.float32)
    target = target.astype(jnp.float32)
    logprobs = jax.nn.log_softmax(x, axis=-1)
    nll_loss = jnp.sum(-logprobs * target, axis=-1)
    smooth_loss = jnp.mean(-logprobs, axis=-1)
    loss = confidence * nll_loss + smoothing * smooth_loss
    return jnp.mean(loss)


if __name__ == "__main__":
    key = jax.random.PRNGKey(0)
    kx, kt = jax.random.split(key)

    N, C = 16, 32  # small shapes: 16 examples, 32 classes
    x = jax.random.normal(kx, (N, C), dtype=jnp.float32)
    labels = jax.random.randint(kt, (N,), 0, C)
    target = jax.nn.one_hot(labels, C, dtype=jnp.float32)

    ref = _reference(x, target, smoothing=0.1)

    out_dense = jax.block_until_ready(label_smoothing_loss(x, target, smoothing=0.1))
    assert jnp.allclose(out_dense, ref, atol=1e-5, rtol=1e-5), (out_dense, ref)

    out_onehot = jax.block_until_ready(
        label_smoothing_loss_onehot(x, labels, smoothing=0.1))
    assert jnp.allclose(out_onehot, ref, atol=1e-5, rtol=1e-5), (out_onehot, ref)

    # Ragged case: N not a multiple of tm, handled by in-kernel masking only.
    N2 = 13
    x2, target2, labels2 = x[:N2], target[:N2], labels[:N2]
    ref2 = _reference(x2, target2, smoothing=0.1)
    out2 = jax.block_until_ready(label_smoothing_loss(x2, target2, smoothing=0.1, tm=8))
    assert jnp.allclose(out2, ref2, atol=1e-5, rtol=1e-5), (out2, ref2)
    out3 = jax.block_until_ready(
        label_smoothing_loss_onehot(x2, labels2, smoothing=0.1, tm=8))
    assert jnp.allclose(out3, ref2, atol=1e-5, rtol=1e-5), (out3, ref2)

    print("KERNEL_OK")
</pallas_src>

<mosaic_0001>
module attributes {stable_mosaic.version = 11 : i64} {
  func.func @_dense_kernel(%arg0: i32, %arg1: memref<16x32xf32, #tpu.memory_space<vmem>>, %arg2: memref<16x32xf32, #tpu.memory_space<vmem>>, %arg3: memref<1x8x128xf32, #tpu.memory_space<vmem>>) attributes {dimension_semantics = [#tpu.dimension_semantics<parallel>], iteration_bounds = array<i64: 1>, scalar_prefetch = 0 : i64, scratch_operands = 0 : i64, tpu.core_type = #tpu.core_type<tc>, window_params = [{transform_indices = @transform_0, window_bounds = array<i64: 16, 32>}, {transform_indices = @transform_1, window_bounds = array<i64: 16, 32>}, {transform_indices = @transform_2, window_bounds = array<i64: 1, 8, 128>}]} {
    %c0 = arith.constant 0 : index
    %c0_0 = arith.constant 0 : index
    %0 = vector.load %arg1[%c0, %c0_0] : memref<16x32xf32, #tpu.memory_space<vmem>>, vector<16x32xf32>
    %c0_1 = arith.constant 0 : index
    %c0_2 = arith.constant 0 : index
    %1 = vector.load %arg2[%c0_1, %c0_2] : memref<16x32xf32, #tpu.memory_space<vmem>>, vector<16x32xf32>
    %cst = arith.constant dense<0xFF800000> : vector<16xf32>
    %2 = vector.multi_reduction <maximumf>, %0, %cst [1] : vector<16x32xf32> to vector<16xf32>
    %3 = vector.shape_cast %2 : vector<16xf32> to vector<16x1xf32>
    %4 = vector.broadcast %3 : vector<16x1xf32> to vector<16x32xf32>
    %5 = arith.subf %0, %4 : vector<16x32xf32>
    %6 = math.exp %5 : vector<16x32xf32>
    %cst_3 = arith.constant dense<0.000000e+00> : vector<16xf32>
    %7 = vector.multi_reduction <add>, %6, %cst_3 [1] : vector<16x32xf32> to vector<16xf32>
    %8 = vector.shape_cast %7 : vector<16xf32> to vector<16x1xf32>
    %9 = math.log %8 : vector<16x1xf32>
    %cst_4 = arith.constant dense<0.000000e+00> : vector<16xf32>
    %10 = vector.multi_reduction <add>, %1, %cst_4 [1] : vector<16x32xf32> to vector<16xf32>
    %11 = vector.shape_cast %10 : vector<16xf32> to vector<16x1xf32>
    %cst_5 = arith.constant 0.899999976 : f32
    %12 = vector.broadcast %cst_5 : f32 to vector<16x32xf32>
    %13 = arith.mulf %12, %1 : vector<16x32xf32>
    %cst_6 = arith.constant 3.125000e-03 : f32
    %14 = vector.broadcast %cst_6 : f32 to vector<16x32xf32>
    %15 = arith.addf %13, %14 : vector<16x32xf32>
    %16 = arith.mulf %5, %15 : vector<16x32xf32>
    %cst_7 = arith.constant dense<0.000000e+00> : vector<16xf32>
    %17 = vector.multi_reduction <add>, %16, %cst_7 [1] : vector<16x32xf32> to vector<16xf32>
    %18 = vector.shape_cast %17 : vector<16xf32> to vector<16x1xf32>
    %cst_8 = arith.constant 0.899999976 : f32
    %19 = vector.broadcast %cst_8 : f32 to vector<16x1xf32>
    %20 = arith.mulf %19, %11 : vector<16x1xf32>
    %cst_9 = arith.constant 1.000000e-01 : f32
    %21 = vector.broadcast %cst_9 : f32 to vector<16x1xf32>
    %22 = arith.addf %20, %21 : vector<16x1xf32>
    %23 = arith.mulf %9, %22 : vector<16x1xf32>
    %24 = arith.subf %23, %18 : vector<16x1xf32>
    %c16_i32 = arith.constant 16 : i32
    %25 = arith.muli %arg0, %c16_i32 : i32
    %26 = tpu.iota {dimensions = array<i32: 0>} : vector<16x1xi32>
    %27 = vector.broadcast %25 : i32 to vector<16x1xi32>
    %28 = arith.addi %27, %26 : vector<16x1xi32>
    %c16_i32_10 = arith.constant 16 : i32
    %29 = vector.broadcast %c16_i32_10 : i32 to vector<16x1xi32>
    %30 = arith.cmpi slt, %28, %29 : vector<16x1xi32>
    %cst_11 = arith.constant 0.000000e+00 : f32
    %31 = vector.broadcast %cst_11 : f32 to vector<16x1xf32>
    %32 = arith.select %30, %24, %31 : vector<16x1xi1>, vector<16x1xf32>
    %33 = vector.shape_cast %32 : vector<16x1xf32> to vector<1x16x1xf32>
    %cst_12 = arith.constant dense<0.000000e+00> : vector<1xf32>
    %34 = vector.multi_reduction <add>, %33, %cst_12 [1, 2] : vector<1x16x1xf32> to vector<1xf32>
    %35 = vector.shape_cast %34 : vector<1xf32> to vector<1x1x1xf32>
    %36 = vector.extract %35[0, 0, 0] : f32 from vector<1x1x1xf32>
    %37 = vector.broadcast %36 : f32 to vector<1x8x128xf32>
    %c0_13 = arith.constant 0 : index
    %c0_14 = arith.constant 0 : index
    %c0_15 = arith.constant 0 : index
    %38 = vector.load %arg3[%c0_13, %c0_14, %c0_15] : memref<1x8x128xf32, #tpu.memory_space<vmem>>, vector<1x8x128xf32>
    tpu.vector_store %arg3[%c0_13, %c0_14, %c0_15], %37 {strides = array<i32>} : memref<1x8x128xf32, #tpu.memory_space<vmem>>, vector<1x8x128xf32>,
    return
  }
  func.func @transform_0(%arg0: i32) -> (i32, i32) {
    %c0_i32 = arith.constant 0 : i32
    %c0_i32_0 = arith.constant 0 : i32
    return %arg0, %c0_i32 : i32, i32
  }
  func.func @transform_1(%arg0: i32) -> (i32, i32) {
    %c0_i32 = arith.constant 0 : i32
    %c0_i32_0 = arith.constant 0 : i32
    return %arg0, %c0_i32 : i32, i32
  }
  func.func @transform_2(%arg0: i32) -> (i32, i32, i32) {
    %c0_i32 = arith.constant 0 : i32
    %c0_i32_0 = arith.constant 0 : i32
    %c0_i32_1 = arith.constant 0 : i32
    return %arg0, %c0_i32, %c0_i32_0 : i32, i32, i32
  }
}

</mosaic_0001>

<llo_original>
// kernel: tpu_custom_call.1
$region0: #{tpu_custom_call.1}
  #allocation0 [shape = 'u32[]', space=smem, size = 0x4, offset = 0x4, fixed_abs, tag = 'smem constant byte address 0x4 - core index']
  #allocation1 [shape = 'u32[144,128]{1,0:T(1,128)}', space=vmem, size = 0x12000, scoped, tag = 'internal scratch']
  %s0 = inlined_call_operand.hbm [shape: f32[16,32], index: 0, kind: input, shape index: {}]
  %s1 = inlined_call_operand.hbm [shape: f32[16,32], index: 1, kind: input, shape index: {}]
  %s2 = inlined_call_operand.hbm [shape: f32[1,8,128], index: 2, kind: output, shape index: {}]
  %s3 = sld [smem:[#allocation0]]
  $region26: #{tpu_custom_call.1} parent=0
    _
  %s5 = ssub.s32 1, %s3
  %s6 = scalar_select 0, %s5, %s3
  $region1: #{tpu_custom_call.1} parent=0
    #allocation2 [shape = 'u8[8192]{0}', space=vmem, size = 0x2000, scoped, tag = 'input window, operand 0, single buffered']
    #allocation3 [shape = 's32[1]{0}', space=sflag, size = 0x4, scoped, tag = 'scoped memory for tpu_custom_call.1']
    #allocation4 [shape = 's32[1]{0}', space=sflag, size = 0x4, scoped, tag = 'scoped memory for tpu_custom_call.1']
    #allocation5 [shape = 'u8[8192]{0}', space=vmem, size = 0x2000, scoped, tag = 'input window, operand 1, single buffered']
    #allocation6 [shape = 's32[1]{0}', space=sflag, size = 0x4, scoped, tag = 'scoped memory for tpu_custom_call.1']
    #allocation7 [shape = 'u8[4096]{0}', space=vmem, size = 0x1000, scoped, tag = 'output window, operand 0, single buffered']
    %7 = vsyncpa [#allocation3], 0
    %8 = vsyncpa [#allocation6], 0
    %9 = vsyncpa [#allocation4], 0
    // Predicated region
    $region2: #{tpu_custom_call.1} parent=1 // pred_check
      _
    $region3: #{tpu_custom_call.1} parent=1 // pred_check_branch
      %11 = sbr.rel (0) target = $region5
    $region4: #{tpu_custom_call.1} parent=1 // pred_region
      %s13 = ssub.s32 256, 256
      %14 = vsyncadd [#allocation3], %s13
      %s15 = sshll.u32 [#allocation2], 4
      %s16 = int_to_ptr.vmem [resolvable:$true] %s15
      %21 = dma.hbm_to_vmem [thread:$0]  %s0, 256, %s16, [#allocation3], 128, 128, 8
    $region5: #{tpu_custom_call.1} parent=1 // pred_fallthru
      _
    // Predicated region
    $region6: #{tpu_custom_call.1} parent=1 // pred_check
      _
    $region7: #{tpu_custom_call.1} parent=1 // pred_check_branch
      %23 = sbr.rel (0) target = $region9
    $region8: #{tpu_custom_call.1} parent=1 // pred_region
      %s25 = ssub.s32 256, 256
      %26 = vsyncadd [#allocation6], %s25
      %s27 = sshll.u32 [#allocation5], 4
      %s28 = int_to_ptr.vmem [resolvable:$true] %s27
      %33 = dma.hbm_to_vmem [thread:$0]  %s1, 256, %s28, [#allocation6], 128, 128, 8
    $region9: #{tpu_custom_call.1} parent=1 // pred_fallthru
      _
    // Predicated region
    $region10: #{tpu_custom_call.1} parent=1 // pred_check
      _
    $region11: #{tpu_custom_call.1} parent=1 // pred_check_branch
      %35 = sbr.rel (0) target = $region13
    $region12: #{tpu_custom_call.1} parent=1 // pred_region
      %36 = dma.done [#allocation3], 256
    $region13: #{tpu_custom_call.1} parent=1 // pred_fallthru
      _
    // Predicated region
    $region14: #{tpu_custom_call.1} parent=1 // pred_check
      _
    $region15: #{tpu_custom_call.1} parent=1 // pred_check_branch
      %38 = sbr.rel (0) target = $region17
    $region16: #{tpu_custom_call.1} parent=1 // pred_region
      %39 = dma.done [#allocation6], 256
    $region17: #{tpu_custom_call.1} parent=1 // pred_fallthru
      _
    %v40 = vld [vmem:[#allocation2] sm:$0xff]
    %v41 = vld [vmem:[#allocation2 + $0x8] sm:$0xff]
    %v42 = vld [vmem:[#allocation5] sm:$0xff]
    %v43 = vld [vmem:[#allocation5 + $0x8] sm:$0xff]
    %vm44 = vcmask 261120
    %v45 = vsel %vm44, %v40, -inf
    %46 = vmax.xlane.f32.xlu0 %v45
    %v47 = vpop.xlane.xlu0 %46
    %v48 = vsel %vm44, %v41, -inf
    %49 = vmax.xlane.f32.xlu0 %v48
    %v50 = vpop.xlane.xlu0 %49
    %v51 = vsub.f32 %v40, %v47
    %v52 = vsub.f32 %v41, %v50
    %v53 = vmul.f32 %v51, 1.442695
    %v54 = vpow.pop %v53
    %v55 = vmul.f32 %v52, 1.442695
    %v56 = vpow.pop %v55
    %v57 = vsel %vm44, %v54, 0.0
    %58 = vadd.xlane.f32.xlu0 %v57
    %v59 = vpop.xlane.xlu0 %58
    %v60 = vsel %vm44, %v56, 0.0
    %61 = vadd.xlane.f32.xlu0 %v60
    %v62 = vpop.xlane.xlu0 %61
    %v63 = vlog2.pop %v59
    %v64 = vmul.f32 %v63, 0.6931472
    %v65 = vlog2.pop %v62
    %v66 = vmul.f32 %v65, 0.6931472
    %v67 = vsel %vm44, %v42, 0.0
    %68 = vadd.xlane.f32.xlu0 %v67
    %v69 = vpop.xlane.xlu0 %68
    %v70 = vsel %vm44, %v43, 0.0
    %71 = vadd.xlane.f32.xlu0 %v70
    %v72 = vpop.xlane.xlu0 %71
    %v73 = vmul.f32 %v42, 0.9
    %v74 = vmul.f32 %v43, 0.9
    %v75 = vadd.f32 %v73, 0.003125
    %v76 = vadd.f32 %v74, 0.003125
    %v77 = vmul.f32 %v51, %v75
    %v78 = vmul.f32 %v52, %v76
    %v79 = vsel %vm44, %v77, 0.0
    %80 = vadd.xlane.f32.xlu0 %v79
    %v81 = vpop.xlane.xlu0 %80
    %v82 = vsel %vm44, %v78, 0.0
    %83 = vadd.xlane.f32.xlu0 %v82
    %v84 = vpop.xlane.xlu0 %83
    %v85 = vmul.f32 %v69, 0.9
    %v86 = vmul.f32 %v72, 0.9
    %v87 = vadd.f32 %v85, 0.1
    %v88 = vadd.f32 %v86, 0.1
    %v89 = vmul.f32 %v64, %v87
    %v90 = vmul.f32 %v66, %v88
    %v91 = vsub.f32 %v89, %v81
    %v92 = vsub.f32 %v90, %v84
    %s93 = smul.u32 0, 16
    %v94 = vlaneseq
    %v95 = vshrl.u32 %v94, 7
    %v96 = vadd.s32 %v95, 8
    %v97 = vstv %s93
    %v98 = vadd.s32 %v97, %v95
    %v99 = vadd.s32 %v97, %v96
    %vm100 = vcmp.lt.s32.totalorder %v98, 16
    %vm101 = vcmp.lt.s32.totalorder %v99, 16
    %v102 = vsel %vm100, %v91, 0.0
    %v103 = vsel %vm101, %v92, 0.0
    %vm104 = vcmask 7168
    %v105 = vsel %vm104, %v102, 0.0
    %v106 = vsel %vm104, %v103, 0.0
    %v107 = vadd.f32 %v105, %v106
    %108 = vadd.xlane.f32.xlu0 %v107
    %v109 = vpop.xlane.xlu0 %108
    %v110 = vrot.slane %v109, 4
    %v111 = vadd.f32 %v109, %v110
    %v112 = vrot.slane %v111, 2
    %v113 = vadd.f32 %v111, %v112
    %v114 = vrot.slane %v113, 1
    %v115 = vadd.f32 %v113, %v114
    %s116 = vtos %v115
    %v117 = vstv %s116
    %118 = vst [vmem:[#allocation7] sm:$0xff] %v117
    // Predicated region
    $region18: #{tpu_custom_call.1} parent=1 // pred_check
      _
    $region19: #{tpu_custom_call.1} parent=1 // pred_check_branch
      %120 = sbr.rel (0) target = $region21
    $region20: #{tpu_custom_call.1} parent=1 // pred_region
      %s122 = ssub.s32 128, 128
      %123 = vsyncadd [#allocation4], %s122
      %s125 = sshll.u32 [#allocation7], 4
      %s126 = int_to_ptr.vmem [resolvable:$true] %s125
      %128 = dma.vmem_to_hbm [thread:$0]  %s126, 128, %s2, [#allocation4]
    $region21: #{tpu_custom_call.1} parent=1 // pred_fallthru
      _
    // Predicated region
    $region22: #{tpu_custom_call.1} parent=1 // pred_check
      _
    $region23: #{tpu_custom_call.1} parent=1 // pred_check_branch
      %130 = sbr.rel (0) target = $region25
    $region24: #{tpu_custom_call.1} parent=1 // pred_region
      %131 = dma.done [#allocation4], 128
    $region25: #{tpu_custom_call.1} parent=1 // pred_fallthru
      _
    %132 = vsyncpa [#allocation3], 1
    %133 = vsyncpa [#allocation6], 1
    %134 = vsyncpa [#allocation4], 1

</llo_original>
